<compile_context>
chip_gen: v6e
topology: v6e:2x2x1
jax: 0.10.0
libtpu: 0.0.40
codegen_flags: <defaults>
</compile_context>

<pallas_src>
import functools

import jax
import jax.numpy as jnp
from jax.experimental import pallas as pl
from jax.experimental.pallas import tpu as pltpu

EPSILON = 0.001
LANE = 128                     # lane width (last dim of every block)
SUBLANE = 8                    # f32 sublane tile
TARGET_BLOCK_BYTES = 2 << 20   # per input per buffer; 2 inputs x 2 bufs = 8 MiB VMEM
MIN_SLAB_BYTES = 512 << 10     # per-TC minimum stream before 2-way megacore split


def _sub_mult(itemsize):
    # Minimum sublane multiple per dtype (f32: 8, bf16/f16: 16, int8/fp8: 32).
    return {4: SUBLANE, 2: 2 * SUBLANE, 1: 4 * SUBLANE}.get(itemsize, SUBLANE)


def _charbonnier_sum_kernel(out_ref, gt_ref, acc_ref, *, eps2, tm):
    """Accumulate a (1, 8, LANE) partial sum of sqrt((o-g)^2 + eps^2) per slab."""
    @pl.when(pl.program_id(1) == 0)
    def _():
        acc_ref[...] = jnp.zeros_like(acc_ref)

    d = out_ref[...].astype(jnp.float32) - gt_ref[...].astype(jnp.float32)
    val = jnp.sqrt(d * d + jnp.float32(eps2))
    # Reduce the (tm, LANE) block to a tile-legal (8, LANE) partial: pure VPU adds
    # across sublane-tile groups; the accumulator store is an unmasked full tile.
    acc_ref[...] += val.reshape(1, tm // SUBLANE, SUBLANE, LANE).sum(axis=1)


def _select_tiling(rows, itemsize):
    sub_mult = _sub_mult(itemsize)
    tm_max = max(sub_mult, TARGET_BLOCK_BYTES // (LANE * itemsize))
    # Split into 2 slabs (leading "parallel" axis -> both TCs on v7x) as soon as
    # each half streams at least MIN_SLAB_BYTES per operand.
    p_slabs = 2 if rows * LANE * itemsize >= 2 * MIN_SLAB_BYTES else 1
    steps = max(1, pl.cdiv(rows, p_slabs * tm_max))
    # Largest sublane-aligned tm such that p_slabs*steps*tm <= rows: the leftover
    # (tail) is < p_slabs*steps*sub_mult rows, i.e. <~0.2% of the data.
    tm = (rows // (p_slabs * steps)) // sub_mult * sub_mult
    tm = min(tm, tm_max)
    return p_slabs, steps, tm


def charbonnier_loss(output, gt, epsilon=EPSILON):
    assert output.shape == gt.shape
    n = output.size
    eps2 = float(epsilon) * float(epsilon)
    flat_o = output.reshape(-1)
    flat_g = gt.reshape(-1)

    itemsize = jnp.dtype(output.dtype).itemsize
    rows = n // LANE

    if rows < _sub_mult(itemsize):
        # Smaller than one sublane tile: not worth a kernel dispatch.
        d = flat_o.astype(jnp.float32) - flat_g.astype(jnp.float32)
        return jnp.sum(jnp.sqrt(d * d + jnp.float32(eps2))) / jnp.float32(n)

    p_slabs, steps, tm = _select_tiling(rows, itemsize)
    rows_bulk = p_slabs * steps * tm
    n_bulk = rows_bulk * LANE

    bulk_o = flat_o[:n_bulk].reshape(rows_bulk, LANE)
    bulk_g = flat_g[:n_bulk].reshape(rows_bulk, LANE)

    kernel = functools.partial(_charbonnier_sum_kernel, eps2=eps2, tm=tm)

    partials = pl.pallas_call(
        kernel,
        out_shape=jax.ShapeDtypeStruct((p_slabs, SUBLANE, LANE), jnp.float32),
        grid_spec=pltpu.PrefetchScalarGridSpec(
            num_scalar_prefetch=0,
            grid=(p_slabs, steps),
            in_specs=[
                pl.BlockSpec((tm, LANE), lambda p, i, s=steps: (p * s + i, 0)),
                pl.BlockSpec((tm, LANE), lambda p, i, s=steps: (p * s + i, 0)),
            ],
            out_specs=pl.BlockSpec((1, SUBLANE, LANE), lambda p, i: (p, 0, 0)),
        ),
        compiler_params=pltpu.CompilerParams(
            dimension_semantics=("parallel", "arbitrary"),
        ),
        cost_estimate=pl.CostEstimate(
            flops=3 * n_bulk,
            transcendentals=n_bulk,
            bytes_accessed=2 * n_bulk * itemsize + p_slabs * SUBLANE * LANE * 4,
        ),
    )(bulk_o, bulk_g)

    total = jnp.sum(partials)

    if n_bulk < n:
        # Tiny (<~0.2%) static tail handled in plain JAX: no padding, no masking,
        # no extra full-array pass.
        to = flat_o[n_bulk:].astype(jnp.float32)
        tg = flat_g[n_bulk:].astype(jnp.float32)
        dt = to - tg
        total = total + jnp.sum(jnp.sqrt(dt * dt + jnp.float32(eps2)))

    return total / jnp.float32(n)


def _ref_loss(output, gt, epsilon=EPSILON):
    return jnp.mean(jnp.sqrt((output - gt) ** 2 + epsilon ** 2))


if __name__ == "__main__":
    key = jax.random.PRNGKey(0)

    # Primary small NCHW case: batch=2, channels=4, spatial=16x16 (exact-fit path).
    shapes = [
        (2, 4, 16, 16),     # exact fit, single slab
        (2, 3, 17, 19),     # unaligned -> small JAX tail path
        (4, 4, 128, 128),   # big enough to trigger the 2-slab "parallel" split
    ]
    for idx, shape in enumerate(shapes):
        k1, k2 = jax.random.split(jax.random.fold_in(key, idx))
        output = jax.random.normal(k1, shape, dtype=jnp.float32)
        gt = jax.random.normal(k2, shape, dtype=jnp.float32)

        loss = charbonnier_loss(output, gt)
        jax.block_until_ready(loss)

        ref = _ref_loss(output, gt)
        assert jnp.allclose(loss, ref, rtol=1e-5, atol=1e-6), (shape, loss, ref)

    print("KERNEL_OK")
</pallas_src>

<mosaic_0001>
module attributes {stable_mosaic.version = 11 : i64} {
  func.func @_charbonnier_sum_kernel(%arg0: i32, %arg1: i32, %arg2: memref<16x128xf32, #tpu.memory_space<vmem>>, %arg3: memref<16x128xf32, #tpu.memory_space<vmem>>, %arg4: memref<1x8x128xf32, #tpu.memory_space<vmem>>) attributes {dimension_semantics = [#tpu.dimension_semantics<parallel>, #tpu.dimension_semantics<arbitrary>], iteration_bounds = array<i64: 1, 1>, scalar_prefetch = 0 : i64, scratch_operands = 0 : i64, tpu.core_type = #tpu.core_type<tc>, window_params = [{transform_indices = @transform_0, window_bounds = array<i64: 16, 128>}, {transform_indices = @transform_1, window_bounds = array<i64: 16, 128>}, {transform_indices = @transform_2, window_bounds = array<i64: 1, 8, 128>}]} {
    %c0_i32 = arith.constant 0 : i32
    %0 = arith.cmpi eq, %arg1, %c0_i32 : i32
    %1 = arith.extui %0 : i1 to i32
    %c0_i32_0 = arith.constant 0 : i32
    %2 = arith.cmpi ne, %1, %c0_i32_0 : i32
    scf.if %2 {
      %cst_11 = arith.constant 0.000000e+00 : f32
      %15 = vector.broadcast %cst_11 : f32 to vector<1x8x128xf32>
      %c0_12 = arith.constant 0 : index
      %c0_13 = arith.constant 0 : index
      %c0_14 = arith.constant 0 : index
      %16 = vector.load %arg4[%c0_12, %c0_13, %c0_14] : memref<1x8x128xf32, #tpu.memory_space<vmem>>, vector<1x8x128xf32>
      tpu.vector_store %arg4[%c0_12, %c0_13, %c0_14], %15 {strides = array<i32>} : memref<1x8x128xf32, #tpu.memory_space<vmem>>, vector<1x8x128xf32>,
    } else {
    }
    %c0 = arith.constant 0 : index
    %c0_1 = arith.constant 0 : index
    %3 = vector.load %arg2[%c0, %c0_1] : memref<16x128xf32, #tpu.memory_space<vmem>>, vector<16x128xf32>
    %c0_2 = arith.constant 0 : index
    %c0_3 = arith.constant 0 : index
    %4 = vector.load %arg3[%c0_2, %c0_3] : memref<16x128xf32, #tpu.memory_space<vmem>>, vector<16x128xf32>
    %5 = arith.subf %3, %4 : vector<16x128xf32>
    %6 = arith.mulf %5, %5 : vector<16x128xf32>
    %cst = arith.constant 9.99999997E-7 : f32
    %7 = vector.broadcast %cst : f32 to vector<16x128xf32>
    %8 = arith.addf %6, %7 : vector<16x128xf32>
    %9 = math.sqrt %8 : vector<16x128xf32>
    %c0_4 = arith.constant 0 : index
    %c0_5 = arith.constant 0 : index
    %c0_6 = arith.constant 0 : index
    %10 = vector.load %arg4[%c0_4, %c0_5, %c0_6] : memref<1x8x128xf32, #tpu.memory_space<vmem>>, vector<1x8x128xf32>
    %11 = vector.shape_cast %9 : vector<16x128xf32> to vector<1x2x8x128xf32>
    %cst_7 = arith.constant dense<0.000000e+00> : vector<1x8x128xf32>
    %12 = vector.multi_reduction <add>, %11, %cst_7 [1] : vector<1x2x8x128xf32> to vector<1x8x128xf32>
    %13 = arith.addf %10, %12 : vector<1x8x128xf32>
    %c0_8 = arith.constant 0 : index
    %c0_9 = arith.constant 0 : index
    %c0_10 = arith.constant 0 : index
    %14 = vector.load %arg4[%c0_8, %c0_9, %c0_10] : memref<1x8x128xf32, #tpu.memory_space<vmem>>, vector<1x8x128xf32>
    tpu.vector_store %arg4[%c0_8, %c0_9, %c0_10], %13 {strides = array<i32>} : memref<1x8x128xf32, #tpu.memory_space<vmem>>, vector<1x8x128xf32>,
    return
  }
  func.func @transform_0(%arg0: i32, %arg1: i32) -> (i32, i32) {
    %c1_i32 = arith.constant 1 : i32
    %0 = arith.muli %arg0, %c1_i32 : i32
    %1 = arith.addi %0, %arg1 : i32
    %c0_i32 = arith.constant 0 : i32
    %c0_i32_0 = arith.constant 0 : i32
    return %1, %c0_i32 : i32, i32
  }
  func.func @transform_1(%arg0: i32, %arg1: i32) -> (i32, i32) {
    %c1_i32 = arith.constant 1 : i32
    %0 = arith.muli %arg0, %c1_i32 : i32
    %1 = arith.addi %0, %arg1 : i32
    %c0_i32 = arith.constant 0 : i32
    %c0_i32_0 = arith.constant 0 : i32
    return %1, %c0_i32 : i32, i32
  }
  func.func @transform_2(%arg0: i32, %arg1: i32) -> (i32, i32, i32) {
    %c0_i32 = arith.constant 0 : i32
    %c0_i32_0 = arith.constant 0 : i32
    %c0_i32_1 = arith.constant 0 : i32
    return %arg0, %c0_i32, %c0_i32_0 : i32, i32, i32
  }
}

</mosaic_0001>

<llo_original>
// kernel: tpu_custom_call.1
$region0: #{tpu_custom_call.1}
  #allocation0 [shape = 'u32[]', space=smem, size = 0x4, offset = 0x4, fixed_abs, tag = 'smem constant byte address 0x4 - core index']
  #allocation1 [shape = 'u32[144,128]{1,0:T(1,128)}', space=vmem, size = 0x12000, scoped, tag = 'internal scratch']
  %s0 = inlined_call_operand.hbm [shape: f32[16,128], index: 0, kind: input, shape index: {}]
  %s1 = inlined_call_operand.hbm [shape: f32[16,128], index: 1, kind: input, shape index: {}]
  %s2 = inlined_call_operand.hbm [shape: f32[1,8,128], index: 2, kind: output, shape index: {}]
  %s3 = sld [smem:[#allocation0]]
  $region30: #{tpu_custom_call.1} parent=0
    _
  %s5 = ssub.s32 1, %s3
  %s6 = scalar_select 0, %s5, %s3
  $region1: #{tpu_custom_call.1} parent=0
    #allocation2 [shape = 'u8[8192]{0}', space=vmem, size = 0x2000, scoped, tag = 'input window, operand 0, single buffered']
    #allocation3 [shape = 's32[1]{0}', space=sflag, size = 0x4, scoped, tag = 'scoped memory for tpu_custom_call.1']
    #allocation4 [shape = 's32[1]{0}', space=sflag, size = 0x4, scoped, tag = 'scoped memory for tpu_custom_call.1']
    #allocation5 [shape = 'u8[8192]{0}', space=vmem, size = 0x2000, scoped, tag = 'input window, operand 1, single buffered']
    #allocation6 [shape = 's32[1]{0}', space=sflag, size = 0x4, scoped, tag = 'scoped memory for tpu_custom_call.1']
    #allocation7 [shape = 'u8[4096]{0}', space=vmem, size = 0x1000, scoped, tag = 'output window, operand 0, single buffered']
    %7 = vsyncpa [#allocation3], 0
    %8 = vsyncpa [#allocation6], 0
    %9 = vsyncpa [#allocation4], 0
    // Predicated region
    $region2: #{tpu_custom_call.1} parent=1 // pred_check
      _
    $region3: #{tpu_custom_call.1} parent=1 // pred_check_branch
      %11 = sbr.rel (0) target = $region5
    $region4: #{tpu_custom_call.1} parent=1 // pred_region
      %s12 = sadd.s32 0, 0
      %s13 = smul.u32 2, %s12
      %s15 = ssub.s32 256, 256
      %16 = vsyncadd [#allocation3], %s15
      %s17 = smul.addr %s13, 128
      %s18 = scalar_lea.hbm %s0, %s17
      %s19 = sshll.u32 [#allocation2], 4
      %s20 = int_to_ptr.vmem [resolvable:$true] %s19
      %25 = dma.hbm_to_vmem [thread:$0]  %s18, 256, %s20, [#allocation3], 128, 128, 8
    $region5: #{tpu_custom_call.1} parent=1 // pred_fallthru
      _
    // Predicated region
    $region6: #{tpu_custom_call.1} parent=1 // pred_check
      _
    $region7: #{tpu_custom_call.1} parent=1 // pred_check_branch
      %27 = sbr.rel (0) target = $region9
    $region8: #{tpu_custom_call.1} parent=1 // pred_region
      %s28 = sadd.s32 0, 0
      %s29 = smul.u32 2, %s28
      %s31 = ssub.s32 256, 256
      %32 = vsyncadd [#allocation6], %s31
      %s33 = smul.addr %s29, 128
      %s34 = scalar_lea.hbm %s1, %s33
      %s35 = sshll.u32 [#allocation5], 4
      %s36 = int_to_ptr.vmem [resolvable:$true] %s35
      %41 = dma.hbm_to_vmem [thread:$0]  %s34, 256, %s36, [#allocation6], 128, 128, 8
    $region9: #{tpu_custom_call.1} parent=1 // pred_fallthru
      _
    // Predicated region
    $region10: #{tpu_custom_call.1} parent=1 // pred_check
      _
    $region11: #{tpu_custom_call.1} parent=1 // pred_check_branch
      %43 = sbr.rel (0) target = $region13
    $region12: #{tpu_custom_call.1} parent=1 // pred_region
      %44 = dma.done [#allocation3], 256
    $region13: #{tpu_custom_call.1} parent=1 // pred_fallthru
      _
    // Predicated region
    $region14: #{tpu_custom_call.1} parent=1 // pred_check
      _
    $region15: #{tpu_custom_call.1} parent=1 // pred_check_branch
      %46 = sbr.rel (0) target = $region17
    $region16: #{tpu_custom_call.1} parent=1 // pred_region
      %47 = dma.done [#allocation6], 256
    $region17: #{tpu_custom_call.1} parent=1 // pred_fallthru
      _
    %s48 = sadd.s32 0, 0
    %s49 = smul.u32 2, %s48
    %s50 = sadd.s32 0, 0
    %s51 = smul.u32 2, %s50
    %p52 = scmp.eq.s32.totalorder 0, 0
    // Predicated region
    $region18: #{tpu_custom_call.1} parent=1 // pred_check
      %p53 = pneg %p52
    $region19: #{tpu_custom_call.1} parent=1 // pred_check_branch
      %55 = sbr.rel (%p53) target = $region21
    $region20: #{tpu_custom_call.1} parent=1 // pred_region
      %56 = vst [vmem:[#allocation7] sm:$0xff] 0.0
    $region21: #{tpu_custom_call.1} parent=1 // pred_fallthru
      _
    %v57 = vld [vmem:[#allocation2] sm:$0xff]
    %v58 = vld [vmem:[#allocation2 + $0x8] sm:$0xff]
    %v59 = vld [vmem:[#allocation5] sm:$0xff]
    %v60 = vld [vmem:[#allocation5 + $0x8] sm:$0xff]
    %v61 = vsub.f32 %v57, %v59
    %v62 = vsub.f32 %v58, %v60
    %v63 = vmul.f32 %v61, %v61
    %v64 = vmul.f32 %v62, %v62
    %v65 = vadd.f32 %v63, 1e-06
    %v66 = vadd.f32 %v64, 1e-06
    %v67 = vrsqrt.pop %v65
    %v68 = vmul.f32 %v65, %v67
    %vm69 = vcmp.eq.f32.partialorder %v65, inf
    %v70 = vsel %vm69, %v65, %v68
    %vm71 = vcmp.eq.f32.partialorder %v65, 0.0
    %v72 = vand.u32 %v65, 2147483648
    %v73 = vsel %vm71, %v72, %v70
    %v74 = vrsqrt.pop %v66
    %v75 = vmul.f32 %v66, %v74
    %vm76 = vcmp.eq.f32.partialorder %v66, inf
    %v77 = vsel %vm76, %v66, %v75
    %vm78 = vcmp.eq.f32.partialorder %v66, 0.0
    %v79 = vand.u32 %v66, 2147483648
    %v80 = vsel %vm78, %v79, %v77
    %v81 = vld [vmem:[#allocation7] sm:$0xff]
    %v82 = vadd.f32 %v73, %v80
    %v83 = vadd.f32 %v81, %v82
    %84 = vst [vmem:[#allocation7] sm:$0xff] %v83
    // Predicated region
    $region22: #{tpu_custom_call.1} parent=1 // pred_check
      _
    $region23: #{tpu_custom_call.1} parent=1 // pred_check_branch
      %86 = sbr.rel (0) target = $region25
    $region24: #{tpu_custom_call.1} parent=1 // pred_region
      %s88 = ssub.s32 128, 128
      %89 = vsyncadd [#allocation4], %s88
      %s91 = sshll.u32 [#allocation7], 4
      %s92 = int_to_ptr.vmem [resolvable:$true] %s91
      %94 = dma.vmem_to_hbm [thread:$0]  %s92, 128, %s2, [#allocation4]
    $region25: #{tpu_custom_call.1} parent=1 // pred_fallthru
      _
    // Predicated region
    $region26: #{tpu_custom_call.1} parent=1 // pred_check
      _
    $region27: #{tpu_custom_call.1} parent=1 // pred_check_branch
      %96 = sbr.rel (0) target = $region29
    $region28: #{tpu_custom_call.1} parent=1 // pred_region
      %97 = dma.done [#allocation4], 128
    $region29: #{tpu_custom_call.1} parent=1 // pred_fallthru
      _
    %98 = vsyncpa [#allocation3], 1
    %99 = vsyncpa [#allocation6], 1
    %100 = vsyncpa [#allocation4], 1

</llo_original>
